<compile_context>
chip_gen: v6e
topology: v6e:2x2x1
jax: 0.10.0
libtpu: 0.0.40
codegen_flags: <defaults>
</compile_context>

<pallas_src>
import functools
import math

import jax
import jax.numpy as jnp
from jax.experimental import pallas as pl
from jax.experimental.pallas import tpu as pltpu


def _silu(x):
    return x * jax.nn.sigmoid(x)


def _round_up(x, m):
    return ((x + m - 1) // m) * m


def _cdiv(a, b):
    return -(-a // b)


def _equiv_update_kernel(
    row_ref,    # [1, tE]  int32  (padded edges carry id == N -> zero one-hot col)
    cd4_ref,    # [tE, 4]  f32    [coord_diff * edge_mask (* 1/norm) | valid]
    hbase_ref,  # [tE, H]  bf16   layer-1 pre-activation (gathers done in wrapper)
    w2_ref,     # [H, H]   bf16
    b2_ref,     # [1, H]   f32
    w3_ref,     # [1, H]   f32
    acc_ref,    # [1, N, 4] f32   output slab, resident across the edge-tile axis
    *,
    use_tanh: bool,
    coords_range: float,
    num_nodes: int,
):
    k = pl.program_id(1)

    @pl.when(k == 0)
    def _init():
        acc_ref[...] = jnp.zeros_like(acc_ref)

    t_e = cd4_ref.shape[0]

    # coord_mlp layer 1: pre-activation streamed in; SiLU in f32.
    h1 = _silu(hbase_ref[...].astype(jnp.float32))                 # [tE, H]

    # layer 2: bf16 MXU matmul, f32 accumulation.
    h2 = jnp.dot(h1.astype(jnp.bfloat16), w2_ref[...],
                 preferred_element_type=jnp.float32) + b2_ref[...]
    h2 = _silu(h2)                                                 # [tE, H]

    # last layer (H -> 1): VPU multiply + lane reduction instead of a
    # 1-output-lane MXU matmul (frees the vector-extended slot).
    s = jnp.sum(h2 * w3_ref[...], axis=-1, keepdims=True)          # [tE, 1]
    if use_tanh:
        s = jnp.tanh(s) * coords_range

    # trans4 = [coord_diff * mask * s | valid]; the 4th column rides along so
    # one scatter matmul also yields the per-node edge counts (for 'mean').
    lane4 = jax.lax.broadcasted_iota(jnp.int32, (t_e, 4), 1)
    s4 = jnp.where(lane4 == 3, 1.0, jnp.broadcast_to(s, (t_e, 4)))
    trans4 = cd4_ref[...] * s4                                      # [tE, 4]

    # unsorted_segment_sum over this tile: one-hot built directly in [N, tE]
    # layout (tE on lanes) so the dot contracts tE with no transpose; f32
    # inputs keep coordinate deltas exact (only 4 output cols -> ~free).
    node_iota = jax.lax.broadcasted_iota(jnp.int32, (num_nodes, t_e), 0)
    onehot = (node_iota == row_ref[...]).astype(jnp.float32)        # [N, tE]
    acc_ref[...] += jnp.dot(onehot, trans4,
                            preferred_element_type=jnp.float32)[None]


def equivariant_update(
    h, coord, edge_index, coord_diff, params,
    edge_attr=None, node_mask=None, edge_mask=None,
    *, tanh=False, coords_range=10.0,
    normalization_factor=1.0, aggregation_method="sum",
    edge_tile=1024, num_parallel_slices=2,
):
    row, col = edge_index
    N, H = h.shape
    E = row.shape[0]

    w1, b1, w2, b2, w3 = params
    d = w1.shape[0] - 2 * H
    if d < 0:
        raise ValueError("w1 is smaller than 2 * hidden_nf")
    if edge_attr is not None and edge_attr.shape[1] != d:
        raise ValueError(
            f"edge_attr has {edge_attr.shape[1]} features but w1 expects {d}")

    f32, bf16 = jnp.float32, jnp.bfloat16

    # ---- layer-1 pre-activation per edge (gather-by-XLA, f32, then bf16) ---
    hwr = jnp.dot(h.astype(f32), w1[:H].astype(f32))                # [N, H]
    hwc = jnp.dot(h.astype(f32), w1[H:2 * H].astype(f32))           # [N, H]
    hbase = hwr[row] + hwc[col] + b1.reshape(1, H).astype(f32)      # [E, H]
    if d > 0:
        ea = (jnp.zeros((E, d), f32) if edge_attr is None
              else edge_attr.astype(f32))
        hbase = hbase + jnp.dot(ea, w1[2 * H:].astype(f32))
    hbase = hbase.astype(bf16)

    # ---- coord deltas with edge_mask / 'sum' normalization pre-folded ------
    scale = jnp.ones((E, 1), f32)
    if edge_mask is not None:
        scale = scale * edge_mask.astype(f32)
    if aggregation_method == "sum":
        scale = scale / float(normalization_factor)
    cd4 = jnp.concatenate(
        [coord_diff.astype(f32) * scale, jnp.ones((E, 1), f32)], axis=1)

    # ---- edge tiling (lane-aligned, VMEM-aware cap for the [N,tE] one-hot) -
    t_e = min(_round_up(max(int(edge_tile), 128), 128), _round_up(E, 128))
    max_te_vmem = max(128, ((4 * 1024 * 1024) // (4 * max(N, 1))) // 128 * 128)
    t_e = max(128, min(t_e, max_te_vmem))

    total_tiles = _cdiv(E, t_e)
    n_slices = max(1, min(int(num_parallel_slices), total_tiles))
    tps = _cdiv(total_tiles, n_slices)           # tiles per parallel slice
    e_pad = n_slices * tps * t_e
    pad = e_pad - E

    # Padded edges: row id = N -> zero one-hot column; cd4 rows are zero.
    row_p = jnp.pad(row.astype(jnp.int32), (0, pad),
                    constant_values=N).reshape(1, e_pad)
    cd4_p = jnp.pad(cd4, ((0, pad), (0, 0)))
    hbase_p = jnp.pad(hbase, ((0, pad), (0, 0)))

    kernel = functools.partial(
        _equiv_update_kernel,
        use_tanh=bool(tanh),
        coords_range=float(coords_range),
        num_nodes=N,
    )

    def edge_map(c, k):
        return (c * tps + k, 0)

    in_specs = [
        pl.BlockSpec((1, t_e), lambda c, k: (0, c * tps + k)),   # row ids
        pl.BlockSpec((t_e, 4), edge_map),                        # cd4
        pl.BlockSpec((t_e, H), edge_map),                        # hbase
        pl.BlockSpec((H, H), lambda c, k: (0, 0)),               # w2
        pl.BlockSpec((1, H), lambda c, k: (0, 0)),               # b2
        pl.BlockSpec((1, H), lambda c, k: (0, 0)),               # w3
    ]
    out_spec = pl.BlockSpec((1, N, 4), lambda c, k: (c, 0, 0))

    flops = e_pad * (2 * H * H + 4 * H + 8 * N)
    transcendentals = e_pad * (2 * H + (1 if tanh else 0))
    bytes_accessed = (e_pad * (4 + 4 * 4 + 2 * H)
                      + H * H * 2 + 8 * H + n_slices * N * 16)

    parts = pl.pallas_call(
        kernel,
        out_shape=jax.ShapeDtypeStruct((n_slices, N, 4), jnp.float32),
        grid_spec=pltpu.PrefetchScalarGridSpec(
            num_scalar_prefetch=0,
            grid=(n_slices, tps),
            in_specs=in_specs,
            out_specs=out_spec,
        ),
        compiler_params=pltpu.CompilerParams(
            # Slice axis is parallel (uses both v7x TensorCores); the edge-tile
            # axis carries the resident accumulator slab -> arbitrary.
            dimension_semantics=("parallel", "arbitrary"),
            vmem_limit_bytes=32 * 1024 * 1024,
        ),
        cost_estimate=pl.CostEstimate(
            flops=int(flops),
            transcendentals=int(transcendentals),
            bytes_accessed=int(bytes_accessed)),
    )(row_p, cd4_p, hbase_p,
      w2.astype(bf16), b2.reshape(1, H).astype(f32), w3.reshape(1, H).astype(f32))

    # ---- combine per-slice partials and finalize (tiny [N, 4] work) --------
    agg4 = jnp.sum(parts, axis=0)                 # [N, 4]
    agg = agg4[:, :3]
    if aggregation_method == "mean":
        cnt = agg4[:, 3:4]
        agg = agg / jnp.where(cnt == 0.0, 1.0, cnt)   # exact division
    out = coord.astype(f32) + agg
    if node_mask is not None:
        out = out * node_mask.astype(f32)
    return out.astype(coord.dtype)


def init_params(key, hidden_nf, edges_in_d):
    """Deterministic init mirroring the PyTorch module's shapes.
    Weights stored as [in, out] (transposed vs. torch Linear.weight)."""
    input_edge = hidden_nf * 2 + edges_in_d
    k1, k2, k3, k4, k5 = jax.random.split(key, 5)

    def linear_default(kw, kb, fan_in, fan_out):
        bound = 1.0 / math.sqrt(fan_in)
        w = jax.random.uniform(kw, (fan_in, fan_out), jnp.float32, -bound, bound)
        b = jax.random.uniform(kb, (fan_out,), jnp.float32, -bound, bound)
        return w, b

    w1, b1 = linear_default(k1, k2, input_edge, hidden_nf)
    w2, b2 = linear_default(k3, k4, hidden_nf, hidden_nf)
    # last layer: xavier_uniform with gain=0.001, no bias
    gain = 0.001
    bound3 = gain * math.sqrt(6.0 / (hidden_nf + 1))
    w3 = jax.random.uniform(k5, (hidden_nf, 1), jnp.float32, -bound3, bound3)
    return (w1, b1, w2, b2, w3)


def _reference(h, coord, edge_index, coord_diff, params, edge_attr,
               node_mask, edge_mask, tanh, coords_range,
               normalization_factor, aggregation_method):
    row, col = edge_index
    w1, b1, w2, b2, w3 = params
    if edge_attr is not None:
        x = jnp.concatenate([h[row], h[col], edge_attr], axis=1)
    else:
        x = jnp.concatenate([h[row], h[col]], axis=1)
    h1 = _silu(x @ w1 + b1)
    h2 = _silu(h1 @ w2 + b2)
    s = h2 @ w3
    if tanh:
        s = jnp.tanh(s) * coords_range
    trans = coord_diff * s
    if edge_mask is not None:
        trans = trans * edge_mask
    agg = jax.ops.segment_sum(trans, row, num_segments=coord.shape[0])
    if aggregation_method == "sum":
        agg = agg / normalization_factor
    elif aggregation_method == "mean":
        norm = jax.ops.segment_sum(jnp.ones_like(trans), row,
                                   num_segments=coord.shape[0])
        norm = jnp.where(norm == 0, 1.0, norm)
        agg = agg / norm
    out = coord + agg
    if node_mask is not None:
        out = out * node_mask
    return out


if __name__ == "__main__":
    key = jax.random.PRNGKey(0)

    def fully_connected(n):
        rows, cols = [], []
        for i in range(n):
            for j in range(n):
                if i != j:
                    rows.append(i)
                    cols.append(j)
        return (jnp.array(rows, dtype=jnp.int32),
                jnp.array(cols, dtype=jnp.int32))

    def make_case(case_key, n, hidden_nf, edges_in_d):
        row, col = fully_connected(n)
        e = row.shape[0]
        k_h, k_c, k_ea, k_em, k_nm, k_p = jax.random.split(case_key, 6)
        h = jax.random.normal(k_h, (n, hidden_nf), jnp.float32)
        coord = jax.random.normal(k_c, (n, 3), jnp.float32)
        coord_diff = coord[row] - coord[col]
        edge_attr = (jax.random.normal(k_ea, (e, edges_in_d), jnp.float32)
                     if edges_in_d > 0 else None)
        edge_mask = (jax.random.uniform(k_em, (e, 1)) > 0.1).astype(jnp.float32)
        node_mask = (jax.random.uniform(k_nm, (n, 1)) > 0.1).astype(jnp.float32)
        params = init_params(k_p, hidden_nf, edges_in_d)
        return dict(h=h, coord=coord, edge_index=(row, col),
                    coord_diff=coord_diff, params=params,
                    edge_attr=edge_attr, node_mask=node_mask,
                    edge_mask=edge_mask)

    k1, k2 = jax.random.split(key)
    cases = [
        (make_case(k1, 8, 32, 1),
         dict(tanh=False, coords_range=10.0, normalization_factor=8.0,
              aggregation_method="sum"),
         dict(edge_tile=1024)),
        (make_case(k1, 8, 32, 1),
         dict(tanh=True, coords_range=10.0, normalization_factor=1.0,
              aggregation_method="mean"),
         dict(edge_tile=1024)),
        # multi-tile + 2-slice parallel grid, no edge_attr path
        (make_case(k2, 40, 32, 0),
         dict(tanh=True, coords_range=10.0, normalization_factor=4.0,
              aggregation_method="sum"),
         dict(edge_tile=256)),
    ]

    for inputs, cfg, tuning in cases:
        ref = _reference(inputs["h"], inputs["coord"], inputs["edge_index"],
                         inputs["coord_diff"], inputs["params"],
                         inputs["edge_attr"], inputs["node_mask"],
                         inputs["edge_mask"], cfg["tanh"], cfg["coords_range"],
                         cfg["normalization_factor"],
                         cfg["aggregation_method"])
        out = equivariant_update(
            inputs["h"], inputs["coord"], inputs["edge_index"],
            inputs["coord_diff"], inputs["params"],
            edge_attr=inputs["edge_attr"], node_mask=inputs["node_mask"],
            edge_mask=inputs["edge_mask"], **cfg, **tuning)
        out = jax.block_until_ready(out)
        assert out.shape == inputs["coord"].shape
        err = float(jnp.max(jnp.abs(out - ref)))
        # bf16 streams into the MXU (f32 accumulation) -> slightly loose tol
        assert jnp.allclose(out, ref, rtol=2e-2, atol=2e-3), (
            f"mismatch vs reference for {cfg}: max abs err {err}")

    print("KERNEL_OK")
</pallas_src>

<mosaic_0001>
module attributes {stable_mosaic.version = 11 : i64} {
  func.func @_equiv_update_kernel(%arg0: i32, %arg1: i32, %arg2: memref<1x128xi32, #tpu.memory_space<vmem>>, %arg3: memref<128x4xf32, #tpu.memory_space<vmem>>, %arg4: memref<128x32xbf16, #tpu.memory_space<vmem>>, %arg5: memref<32x32xbf16, #tpu.memory_space<vmem>>, %arg6: memref<1x32xf32, #tpu.memory_space<vmem>>, %arg7: memref<1x32xf32, #tpu.memory_space<vmem>>, %arg8: memref<1x8x4xf32, #tpu.memory_space<vmem>>) attributes {dimension_semantics = [#tpu.dimension_semantics<parallel>, #tpu.dimension_semantics<arbitrary>], iteration_bounds = array<i64: 1, 1>, scalar_prefetch = 0 : i64, scratch_operands = 0 : i64, tpu.core_type = #tpu.core_type<tc>, window_params = [{transform_indices = @transform_0, window_bounds = array<i64: 1, 128>}, {transform_indices = @transform_1, window_bounds = array<i64: 128, 4>}, {transform_indices = @transform_2, window_bounds = array<i64: 128, 32>}, {pipeline_mode = #tpu.pipeline_mode<synchronous>, transform_indices = @transform_3, window_bounds = array<i64: 32, 32>}, {pipeline_mode = #tpu.pipeline_mode<synchronous>, transform_indices = @transform_4, window_bounds = array<i64: 1, 32>}, {pipeline_mode = #tpu.pipeline_mode<synchronous>, transform_indices = @transform_5, window_bounds = array<i64: 1, 32>}, {transform_indices = @transform_6, window_bounds = array<i64: 1, 8, 4>}]} {
    %c0_i32 = arith.constant 0 : i32
    %0 = arith.cmpi eq, %arg1, %c0_i32 : i32
    %1 = arith.extui %0 : i1 to i32
    %c0_i32_0 = arith.constant 0 : i32
    %2 = arith.cmpi ne, %1, %c0_i32_0 : i32
    scf.if %2 {
      %cst_23 = arith.constant 0.000000e+00 : f32
      %48 = vector.broadcast %cst_23 : f32 to vector<1x8x4xf32>
      %c0_24 = arith.constant 0 : index
      %c0_25 = arith.constant 0 : index
      %c0_26 = arith.constant 0 : index
      %49 = vector.load %arg8[%c0_24, %c0_25, %c0_26] : memref<1x8x4xf32, #tpu.memory_space<vmem>>, vector<1x8x4xf32>
      tpu.vector_store %arg8[%c0_24, %c0_25, %c0_26], %48 {strides = array<i32>} : memref<1x8x4xf32, #tpu.memory_space<vmem>>, vector<1x8x4xf32>,
    } else {
    }
    %c0 = arith.constant 0 : index
    %c0_1 = arith.constant 0 : index
    %3 = vector.load %arg4[%c0, %c0_1] : memref<128x32xbf16, #tpu.memory_space<vmem>>, vector<128x32xbf16>
    %4 = arith.extf %3 : vector<128x32xbf16> to vector<128x32xf32>
    %5 = arith.negf %4 : vector<128x32xf32>
    %6 = math.exp %5 : vector<128x32xf32>
    %cst = arith.constant 1.000000e+00 : f32
    %7 = vector.broadcast %cst : f32 to vector<128x32xf32>
    %8 = arith.addf %7, %6 : vector<128x32xf32>
    %9 = arith.divf %7, %8 : vector<128x32xf32>
    %10 = arith.mulf %4, %9 : vector<128x32xf32>
    %11 = arith.truncf %10 : vector<128x32xf32> to vector<128x32xbf16>
    %c0_2 = arith.constant 0 : index
    %c0_3 = arith.constant 0 : index
    %12 = vector.load %arg5[%c0_2, %c0_3] : memref<32x32xbf16, #tpu.memory_space<vmem>>, vector<32x32xbf16>
    %cst_4 = arith.constant dense<0.000000e+00> : vector<128x32xf32>
    %13 = tpu.matmul %11, %12, %cst_4 {dimension_numbers = #tpu.dot_dimension_numbers<[1], [0], [0], [1], [0, 0, 1, 1], [], []>} : vector<128x32xbf16>, vector<32x32xbf16>, vector<128x32xf32> -> vector<128x32xf32>
    %c0_5 = arith.constant 0 : index
    %c0_6 = arith.constant 0 : index
    %14 = vector.load %arg6[%c0_5, %c0_6] : memref<1x32xf32, #tpu.memory_space<vmem>>, vector<1x32xf32>
    %15 = vector.broadcast %14 : vector<1x32xf32> to vector<128x32xf32>
    %16 = arith.addf %13, %15 : vector<128x32xf32>
    %17 = arith.negf %16 : vector<128x32xf32>
    %18 = math.exp %17 : vector<128x32xf32>
    %cst_7 = arith.constant 1.000000e+00 : f32
    %19 = vector.broadcast %cst_7 : f32 to vector<128x32xf32>
    %20 = arith.addf %19, %18 : vector<128x32xf32>
    %21 = arith.divf %19, %20 : vector<128x32xf32>
    %22 = arith.mulf %16, %21 : vector<128x32xf32>
    %c0_8 = arith.constant 0 : index
    %c0_9 = arith.constant 0 : index
    %23 = vector.load %arg7[%c0_8, %c0_9] : memref<1x32xf32, #tpu.memory_space<vmem>>, vector<1x32xf32>
    %24 = vector.broadcast %23 : vector<1x32xf32> to vector<128x32xf32>
    %25 = arith.mulf %22, %24 : vector<128x32xf32>
    %cst_10 = arith.constant dense<0.000000e+00> : vector<128xf32>
    %26 = vector.multi_reduction <add>, %25, %cst_10 [1] : vector<128x32xf32> to vector<128xf32>
    %27 = vector.shape_cast %26 : vector<128xf32> to vector<128x1xf32>
    %28 = tpu.iota {dimensions = array<i32: 1>} : vector<128x4xi32>
    %c3_i32 = arith.constant 3 : i32
    %29 = vector.broadcast %c3_i32 : i32 to vector<128x4xi32>
    %30 = arith.cmpi eq, %28, %29 : vector<128x4xi32>
    %31 = vector.shape_cast %27 : vector<128x1xf32> to vector<128x1xf32>
    %32 = vector.broadcast %31 : vector<128x1xf32> to vector<128x4xf32>
    %cst_11 = arith.constant 1.000000e+00 : f32
    %33 = vector.broadcast %cst_11 : f32 to vector<128x4xf32>
    %34 = arith.select %30, %33, %32 : vector<128x4xi1>, vector<128x4xf32>
    %c0_12 = arith.constant 0 : index
    %c0_13 = arith.constant 0 : index
    %35 = vector.load %arg3[%c0_12, %c0_13] : memref<128x4xf32, #tpu.memory_space<vmem>>, vector<128x4xf32>
    %36 = arith.mulf %35, %34 : vector<128x4xf32>
    %37 = tpu.iota {dimensions = array<i32: 0>} : vector<8x128xi32>
    %c0_14 = arith.constant 0 : index
    %c0_15 = arith.constant 0 : index
    %38 = vector.load %arg2[%c0_14, %c0_15] : memref<1x128xi32, #tpu.memory_space<vmem>>, vector<1x128xi32>
    %39 = vector.broadcast %38 : vector<1x128xi32> to vector<8x128xi32>
    %40 = arith.cmpi eq, %37, %39 : vector<8x128xi32>
    %41 = arith.extui %40 : vector<8x128xi1> to vector<8x128xi32>
    %42 = arith.sitofp %41 : vector<8x128xi32> to vector<8x128xf32>
    %c0_16 = arith.constant 0 : index
    %c0_17 = arith.constant 0 : index
    %c0_18 = arith.constant 0 : index
    %43 = vector.load %arg8[%c0_16, %c0_17, %c0_18] : memref<1x8x4xf32, #tpu.memory_space<vmem>>, vector<1x8x4xf32>
    %cst_19 = arith.constant dense<0.000000e+00> : vector<8x4xf32>
    %44 = tpu.matmul %42, %36, %cst_19 {dimension_numbers = #tpu.dot_dimension_numbers<[1], [0], [0], [1], [0, 0, 1, 1], [], []>} : vector<8x128xf32>, vector<128x4xf32>, vector<8x4xf32> -> vector<8x4xf32>
    %45 = vector.shape_cast %44 : vector<8x4xf32> to vector<1x8x4xf32>
    %46 = arith.addf %43, %45 : vector<1x8x4xf32>
    %c0_20 = arith.constant 0 : index
    %c0_21 = arith.constant 0 : index
    %c0_22 = arith.constant 0 : index
    %47 = vector.load %arg8[%c0_20, %c0_21, %c0_22] : memref<1x8x4xf32, #tpu.memory_space<vmem>>, vector<1x8x4xf32>
    tpu.vector_store %arg8[%c0_20, %c0_21, %c0_22], %46 {strides = array<i32>} : memref<1x8x4xf32, #tpu.memory_space<vmem>>, vector<1x8x4xf32>,
    return
  }
  func.func @transform_0(%arg0: i32, %arg1: i32) -> (i32, i32) {
    %c1_i32 = arith.constant 1 : i32
    %0 = arith.muli %arg0, %c1_i32 : i32
    %1 = arith.addi %0, %arg1 : i32
    %c0_i32 = arith.constant 0 : i32
    %c0_i32_0 = arith.constant 0 : i32
    return %c0_i32, %1 : i32, i32
  }
  func.func @transform_1(%arg0: i32, %arg1: i32) -> (i32, i32) {
    %c1_i32 = arith.constant 1 : i32
    %0 = arith.muli %arg0, %c1_i32 : i32
    %1 = arith.addi %0, %arg1 : i32
    %c0_i32 = arith.constant 0 : i32
    %c0_i32_0 = arith.constant 0 : i32
    return %1, %c0_i32 : i32, i32
  }
  func.func @transform_2(%arg0: i32, %arg1: i32) -> (i32, i32) {
    %c1_i32 = arith.constant 1 : i32
    %0 = arith.muli %arg0, %c1_i32 : i32
    %1 = arith.addi %0, %arg1 : i32
    %c0_i32 = arith.constant 0 : i32
    %c0_i32_0 = arith.constant 0 : i32
    return %1, %c0_i32 : i32, i32
  }
  func.func @transform_3(%arg0: i32, %arg1: i32) -> (i32, i32) {
    %c0_i32 = arith.constant 0 : i32
    %c0_i32_0 = arith.constant 0 : i32
    %c0_i32_1 = arith.constant 0 : i32
    return %c0_i32, %c0_i32_0 : i32, i32
  }
  func.func @transform_4(%arg0: i32, %arg1: i32) -> (i32, i32) {
    %c0_i32 = arith.constant 0 : i32
    %c0_i32_0 = arith.constant 0 : i32
    %c0_i32_1 = arith.constant 0 : i32
    return %c0_i32, %c0_i32_0 : i32, i32
  }
  func.func @transform_5(%arg0: i32, %arg1: i32) -> (i32, i32) {
    %c0_i32 = arith.constant 0 : i32
    %c0_i32_0 = arith.constant 0 : i32
    %c0_i32_1 = arith.constant 0 : i32
    return %c0_i32, %c0_i32_0 : i32, i32
  }
  func.func @transform_6(%arg0: i32, %arg1: i32) -> (i32, i32, i32) {
    %c0_i32 = arith.constant 0 : i32
    %c0_i32_0 = arith.constant 0 : i32
    %c0_i32_1 = arith.constant 0 : i32
    return %arg0, %c0_i32, %c0_i32_0 : i32, i32, i32
  }
}

</mosaic_0001>

<llo_original>
// kernel: tpu_custom_call.1
$region0: #{tpu_custom_call.1}
  #allocation0 [shape = 'u32[]', space=smem, size = 0x4, offset = 0x4, fixed_abs, tag = 'smem constant byte address 0x4 - core index']
  #allocation1 [shape = 'u32[144,128]{1,0:T(1,128)}', space=vmem, size = 0x12000, scoped, tag = 'internal scratch']
  %s0 = inlined_call_operand.vmem [shape: s32[1,128], index: 0, kind: input, shape index: {}]
  %s1 = inlined_call_operand.vmem [shape: f32[128,4], index: 1, kind: input, shape index: {}]
  %s2 = inlined_call_operand.vmem [shape: bf16[128,32], index: 2, kind: input, shape index: {}]
  %s3 = inlined_call_operand.vmem [shape: bf16[32,32], index: 3, kind: input, shape index: {}]
  %s4 = inlined_call_operand.vmem [shape: f32[1,32], index: 4, kind: input, shape index: {}]
  %s5 = inlined_call_operand.vmem [shape: f32[1,32], index: 5, kind: input, shape index: {}]
  %s6 = inlined_call_operand.vmem [shape: f32[1,8,4], index: 6, kind: output, shape index: {}]
  %s7 = sld [smem:[#allocation0]]
  $region38: #{tpu_custom_call.1} parent=0
    _
  %s9 = ssub.s32 1, %s7
  %s10 = scalar_select 0, %s9, %s7
  // Predicated region
  $region2: #{tpu_custom_call.1} parent=0 // pred_check
    _
  $region3: #{tpu_custom_call.1} parent=0 // pred_check_branch
    %12 = sbr.rel (0) target = $region5
  $region4: #{tpu_custom_call.1} parent=0 // pred_region
    %s13 = sadd.s32 0, 0
    %p14 = scmp.lt.s32.totalorder %s13, 0
    %s15 = scalar_select %p14, %s13, 0
    %s16 = scalar_lea.vmem %s0, %s15
    %s17 = sadd.s32 0, 0
  $region5: #{tpu_custom_call.1} parent=0 // pred_fallthru
    _
  // Predicated region
  $region6: #{tpu_custom_call.1} parent=0 // pred_check
    _
  $region7: #{tpu_custom_call.1} parent=0 // pred_check_branch
    %19 = sbr.rel (0) target = $region9
  $region8: #{tpu_custom_call.1} parent=0 // pred_region
    %s20 = sadd.s32 0, 0
    %s21 = smul.u32 16, %s20
    %p22 = scmp.lt.s32.totalorder %s21, 15
    %s23 = scalar_select %p22, %s21, 15
    %s24 = smul.addr %s23, 8
    %s25 = scalar_lea.vmem %s1, %s24
    %s26 = sadd.s32 0, 0
    %s27 = smul.u32 16, %s26
  $region9: #{tpu_custom_call.1} parent=0 // pred_fallthru
    _
  // Predicated region
  $region10: #{tpu_custom_call.1} parent=0 // pred_check
    _
  $region11: #{tpu_custom_call.1} parent=0 // pred_check_branch
    %29 = sbr.rel (0) target = $region13
  $region12: #{tpu_custom_call.1} parent=0 // pred_region
    %s30 = sadd.s32 0, 0
    %s31 = smul.u32 16, %s30
    %p32 = scmp.lt.s32.totalorder %s31, 15
    %s33 = scalar_select %p32, %s31, 15
    %s34 = smul.addr %s33, 4
    %s35 = scalar_lea.vmem %s2, %s34
    %s36 = sadd.s32 0, 0
    %s37 = smul.u32 16, %s36
  $region13: #{tpu_custom_call.1} parent=0 // pred_fallthru
    _
  // Predicated region
  $region14: #{tpu_custom_call.1} parent=0 // pred_check
    _
  $region15: #{tpu_custom_call.1} parent=0 // pred_check_branch
    %39 = sbr.rel (0) target = $region17
  $region16: #{tpu_custom_call.1} parent=0 // pred_region
    _
  $region17: #{tpu_custom_call.1} parent=0 // pred_fallthru
    _
  // Predicated region
  $region18: #{tpu_custom_call.1} parent=0 // pred_check
    _
  $region19: #{tpu_custom_call.1} parent=0 // pred_check_branch
    %41 = sbr.rel (0) target = $region21
  $region20: #{tpu_custom_call.1} parent=0 // pred_region
    _
  $region21: #{tpu_custom_call.1} parent=0 // pred_fallthru
    _
  // Predicated region
  $region22: #{tpu_custom_call.1} parent=0 // pred_check
    _
  $region23: #{tpu_custom_call.1} parent=0 // pred_check_branch
    %43 = sbr.rel (0) target = $region25
  $region24: #{tpu_custom_call.1} parent=0 // pred_region
    _
  $region25: #{tpu_custom_call.1} parent=0 // pred_fallthru
    _
  %s44 = sadd.s32 0, 0
  %p45 = scmp.lt.s32.totalorder %s44, 0
  %s46 = scalar_select %p45, %s44, 0
  %s47 = scalar_lea.vmem %s0, %s46
  %s48 = sadd.s32 0, 0
  %s49 = smul.u32 16, %s48
  %p50 = scmp.lt.s32.totalorder %s49, 15
  %s51 = scalar_select %p50, %s49, 15
  %s52 = smul.addr %s51, 8
  %s53 = scalar_lea.vmem %s1, %s52
  %s54 = sadd.s32 0, 0
  %s55 = smul.u32 16, %s54
  %p56 = scmp.lt.s32.totalorder %s55, 15
  %s57 = scalar_select %p56, %s55, 15
  %s58 = smul.addr %s57, 4
  %s59 = scalar_lea.vmem %s2, %s58
  %s60 = sadd.s32 0, 0
  %p61 = scmp.lt.s32.totalorder %s60, 0
  %s62 = scalar_select %p61, %s60, 0
  %s63 = scalar_lea.vmem %s0, %s62
  %s64 = sadd.s32 0, 0
  %s65 = sadd.s32 0, 0
  %s66 = smul.u32 16, %s65
  %p67 = scmp.lt.s32.totalorder %s66, 15
  %s68 = scalar_select %p67, %s66, 15
  %s69 = smul.addr %s68, 8
  %s70 = scalar_lea.vmem %s1, %s69
  %s71 = sadd.s32 0, 0
  %s72 = smul.u32 16, %s71
  %s73 = sadd.s32 0, 0
  %s74 = smul.u32 16, %s73
  %p75 = scmp.lt.s32.totalorder %s74, 15
  %s76 = scalar_select %p75, %s74, 15
  %s77 = smul.addr %s76, 4
  %s78 = scalar_lea.vmem %s2, %s77
  %s79 = sadd.s32 0, 0
  %s80 = smul.u32 16, %s79
  %p82 = scmp.eq.s32.totalorder 0, 0
  // Predicated region
  $region26: #{tpu_custom_call.1} parent=0 // pred_check
    %p83 = pneg %p82
  $region27: #{tpu_custom_call.1} parent=0 // pred_check_branch
    %85 = sbr.rel (%p83) target = $region29
  $region28: #{tpu_custom_call.1} parent=0 // pred_region
    %vm86 = vcmask 31744
    %87 = vst.msk [vmem:[%s6] sm:$0xff] %vm86, 0.0
  $region29: #{tpu_custom_call.1} parent=0 // pred_fallthru
    _
  %v88 = vld [vmem:[%s78] sm:$0xf]
  %v89 = vld [vmem:[%s78 + $0x4] sm:$0xf]
  %v90 = vld [vmem:[%s78 + $0x8] sm:$0xf]
  %v91 = vld [vmem:[%s78 + $0xc] sm:$0xf]
  %v92 = vld [vmem:[%s78 + $0x10] sm:$0xf]
  %v93 = vld [vmem:[%s78 + $0x14] sm:$0xf]
  %v94 = vld [vmem:[%s78 + $0x18] sm:$0xf]
  %v95 = vld [vmem:[%s78 + $0x1c] sm:$0xf]
  %v96 = vld [vmem:[%s78 + $0x20] sm:$0xf]
  %v97 = vld [vmem:[%s78 + $0x24] sm:$0xf]
  %v98 = vld [vmem:[%s78 + $0x28] sm:$0xf]
  %v99 = vld [vmem:[%s78 + $0x2c] sm:$0xf]
  %v100 = vld [vmem:[%s78 + $0x30] sm:$0xf]
  %v101 = vld [vmem:[%s78 + $0x34] sm:$0xf]
  %v102 = vld [vmem:[%s78 + $0x38] sm:$0xf]
  %v103 = vld [vmem:[%s78 + $0x3c] sm:$0xf]
  %v104 = vunpack.c.l.bf16 %v88
  %v105 = vunpack.c.l.bf16 %v89
  %v106 = vunpack.c.l.bf16 %v90
  %v107 = vunpack.c.l.bf16 %v91
  %v108 = vunpack.c.l.bf16 %v92
  %v109 = vunpack.c.l.bf16 %v93
  %v110 = vunpack.c.l.bf16 %v94
  %v111 = vunpack.c.l.bf16 %v95
  %v112 = vunpack.c.l.bf16 %v96
  %v113 = vunpack.c.l.bf16 %v97
  %v114 = vunpack.c.l.bf16 %v98
  %v115 = vunpack.c.l.bf16 %v99
  %v116 = vunpack.c.l.bf16 %v100
  %v117 = vunpack.c.l.bf16 %v101
  %v118 = vunpack.c.l.bf16 %v102
  %v119 = vunpack.c.l.bf16 %v103
  %v120 = vxor.u32 %v104, 2147483648
  %v121 = vxor.u32 %v105, 2147483648
  %v122 = vxor.u32 %v106, 2147483648
  %v123 = vxor.u32 %v107, 2147483648
  %v124 = vxor.u32 %v108, 2147483648
  %v125 = vxor.u32 %v109, 2147483648
  %v126 = vxor.u32 %v110, 2147483648
  %v127 = vxor.u32 %v111, 2147483648
  %v128 = vxor.u32 %v112, 2147483648
  %v129 = vxor.u32 %v113, 2147483648
  %v130 = vxor.u32 %v114, 2147483648
  %v131 = vxor.u32 %v115, 2147483648
  %v132 = vxor.u32 %v116, 2147483648
  %v133 = vxor.u32 %v117, 2147483648
  %v134 = vxor.u32 %v118, 2147483648
  %v135 = vxor.u32 %v119, 2147483648
  %v136 = vmul.f32 %v120, 1.442695
  %v137 = vpow.pop %v136
  %v138 = vmul.f32 %v121, 1.442695
  %v139 = vpow.pop %v138
  %v140 = vmul.f32 %v122, 1.442695
  %v141 = vpow.pop %v140
  %v142 = vmul.f32 %v123, 1.442695
  %v143 = vpow.pop %v142
  %v144 = vmul.f32 %v124, 1.442695
  %v145 = vpow.pop %v144
  %v146 = vmul.f32 %v125, 1.442695
  %v147 = vpow.pop %v146
  %v148 = vmul.f32 %v126, 1.442695
  %v149 = vpow.pop %v148
  %v150 = vmul.f32 %v127, 1.442695
  %v151 = vpow.pop %v150
  %v152 = vmul.f32 %v128, 1.442695
  %v153 = vpow.pop %v152
  %v154 = vmul.f32 %v129, 1.442695
  %v155 = vpow.pop %v154
  %v156 = vmul.f32 %v130, 1.442695
  %v157 = vpow.pop %v156
  %v158 = vmul.f32 %v131, 1.442695
  %v159 = vpow.pop %v158
  %v160 = vmul.f32 %v132, 1.442695
  %v161 = vpow.pop %v160
  %v162 = vmul.f32 %v133, 1.442695
  %v163 = vpow.pop %v162
  %v164 = vmul.f32 %v134, 1.442695
  %v165 = vpow.pop %v164
  %v166 = vmul.f32 %v135, 1.442695
  %v167 = vpow.pop %v166
  %v168 = vadd.f32 %v137, 1.0
  %v169 = vadd.f32 %v139, 1.0
  %v170 = vadd.f32 %v141, 1.0
  %v171 = vadd.f32 %v143, 1.0
  %v172 = vadd.f32 %v145, 1.0
  %v173 = vadd.f32 %v147, 1.0
  %v174 = vadd.f32 %v149, 1.0
  %v175 = vadd.f32 %v151, 1.0
  %v176 = vadd.f32 %v153, 1.0
  %v177 = vadd.f32 %v155, 1.0
  %v178 = vadd.f32 %v157, 1.0
  %v179 = vadd.f32 %v159, 1.0
  %v180 = vadd.f32 %v161, 1.0
  %v181 = vadd.f32 %v163, 1.0
  %v182 = vadd.f32 %v165, 1.0
  %v183 = vadd.f32 %v167, 1.0
  %v184 = vrcp.pop %v168
  %v185 = vmul.f32 1.0, %v184
  %v186 = vrcp.pop %v169
  %v187 = vmul.f32 1.0, %v186
  %v188 = vrcp.pop %v170
  %v189 = vmul.f32 1.0, %v188
  %v190 = vrcp.pop %v171
  %v191 = vmul.f32 1.0, %v190
  %v192 = vrcp.pop %v172
  %v193 = vmul.f32 1.0, %v192
  %v194 = vrcp.pop %v173
  %v195 = vmul.f32 1.0, %v194
  %v196 = vrcp.pop %v174
  %v197 = vmul.f32 1.0, %v196
  %v198 = vrcp.pop %v175
  %v199 = vmul.f32 1.0, %v198
  %v200 = vrcp.pop %v176
  %v201 = vmul.f32 1.0, %v200
  %v202 = vrcp.pop %v177
  %v203 = vmul.f32 1.0, %v202
  %v204 = vrcp.pop %v178
  %v205 = vmul.f32 1.0, %v204
  %v206 = vrcp.pop %v179
  %v207 = vmul.f32 1.0, %v206
  %v208 = vrcp.pop %v180
  %v209 = vmul.f32 1.0, %v208
  %v210 = vrcp.pop %v181
  %v211 = vmul.f32 1.0, %v210
  %v212 = vrcp.pop %v182
  %v213 = vmul.f32 1.0, %v212
  %v214 = vrcp.pop %v183
  %v215 = vmul.f32 1.0, %v214
  %v216 = vmul.f32 %v104, %v185
  %v217 = vmul.f32 %v105, %v187
  %v218 = vmul.f32 %v106, %v189
  %v219 = vmul.f32 %v107, %v191
  %v220 = vmul.f32 %v108, %v193
  %v221 = vmul.f32 %v109, %v195
  %v222 = vmul.f32 %v110, %v197
  %v223 = vmul.f32 %v111, %v199
  %v224 = vmul.f32 %v112, %v201
  %v225 = vmul.f32 %v113, %v203
  %v226 = vmul.f32 %v114, %v205
  %v227 = vmul.f32 %v115, %v207
  %v228 = vmul.f32 %v116, %v209
  %v229 = vmul.f32 %v117, %v211
  %v230 = vmul.f32 %v118, %v213
  %v231 = vmul.f32 %v119, %v215
  %v232 = vpack.c.bf16 %v217, %v216
  %v233 = vpack.c.bf16 %v219, %v218
  %v234 = vpack.c.bf16 %v221, %v220
  %v235 = vpack.c.bf16 %v223, %v222
  %v236 = vpack.c.bf16 %v225, %v224
  %v237 = vpack.c.bf16 %v227, %v226
  %v238 = vpack.c.bf16 %v229, %v228
  %v239 = vpack.c.bf16 %v231, %v230
  %v240 = vld [vmem:[%s3] sm:$0xf]
  %v241 = vld [vmem:[%s3 + $0x4] sm:$0xf]
  %v242 = vld [vmem:[%s3 + $0x8] sm:$0xf]
  %v243 = vld [vmem:[%s3 + $0xc] sm:$0xf]
  %v244 = vld [vmem:[%s4] sm:$0x1]
  %v246 = vlaneseq
  %v247 = vshrl.u32 %v246, 7
  %v248 = vsub.s32 0, %v247
  %v249 = vrot.slane %v244, %v248
  %v255 = vunpack.c.l.b16 %v240
  %v256 = vunpack.c.l.b16 %v241
  %v257 = vunpack.c.l.b16 %v242
  %v258 = vunpack.c.l.b16 %v243
  %v259 = vpack.c.b16 %v256, %v255
  %v260 = vpack.c.b16 %v258, %v257
  %vm263 = vcmask 261120
  %v265 = vsel %vm263, %v232, 0
  %v268 = vsel %vm263, %v233, 0
  %v271 = vsel %vm263, %v234, 0
  %v274 = vsel %vm263, %v235, 0
  %v277 = vsel %vm263, %v236, 0
  %v280 = vsel %vm263, %v237, 0
  %v283 = vsel %vm263, %v238, 0
  %v286 = vsel %vm263, %v239, 0
  %288 = vmatprep.subr.bf16.mxu0 0
  %289 = vmatpush1.bf16.msra.mxu0 0
  %290 = vmatprep.subr.bf16.mxu0 0
  %291 = vmatpush1.bf16.msra.mxu0 0
  %292 = vmatprep.subr.bf16.mxu0 0
  %293 = vmatpush1.bf16.msra.mxu0 0
  %294 = vmatprep.subr.bf16.mxu0 0
  %295 = vmatpush1.bf16.msra.mxu0 0
  %296 = vmatprep.subr.bf16.mxu0 0
  %297 = vmatpush1.bf16.msra.mxu0 0
  %298 = vmatprep.subr.bf16.mxu0 0
  %299 = vmatpush1.bf16.msra.mxu0 0
  %300 = vmatprep.subr.bf16.mxu0 0
  %301 = vmatpush1.bf16.msra.mxu0 %v260
  %302 = vmatprep.subr.bf16.mxu0 0
  %303 = vmatpush1.bf16.msra.mxu0 %v259
  %304 = vmatprep.subr.bf16.mxu0 0
  %305 = vmatpush2.bf16.msra.mxu0 0
  %306 = vmatprep.subr.bf16.mxu0 0
  %307 = vmatpush2.bf16.msra.mxu0 0
  %308 = vmatprep.subr.bf16.mxu0 0
  %309 = vmatpush2.bf16.msra.mxu0 0
  %310 = vmatprep.subr.bf16.mxu0 0
  %311 = vmatpush2.bf16.msra.mxu0 0
  %312 = vmatprep.subr.bf16.mxu0 0
  %313 = vmatpush2.bf16.msra.mxu0 0
  %314 = vmatprep.subr.bf16.mxu0 0
  %315 = vmatpush2.bf16.msra.mxu0 0
  %316 = vmatprep.subr.bf16.mxu0 0
  %317 = vmatpush2.bf16.msra.mxu0 0
  %318 = vmatprep.subr.bf16.mxu0 0
  %319 = vmatpush2.bf16.msra.mxu0 0
  %320 = vmatprep.mubr.bf16.mxu0 0
  %321 = vmatmul.mubr.bf16.gmra.mxu0 %v265
  %v322 = vpop.f32.mrf.mxu0
  %v323 = vadd.f32 %v249, %v322
  %v324 = vpop.f32.mrf.mxu0
  %v325 = vpop.f32.mrf.mxu0
  %v326 = vadd.f32 %v249, %v325
  %v327 = vpop.f32.mrf.mxu0
  %328 = vmatprep.mubr.bf16.mxu0 0
  %329 = vmatmul.mubr.bf16.gmra.mxu0 %v268
  %v330 = vpop.f32.mrf.mxu0
  %v331 = vadd.f32 %v249, %v330
  %v332 = vpop.f32.mrf.mxu0
  %v333 = vpop.f32.mrf.mxu0
  %v334 = vadd.f32 %v249, %v333
  %v335 = vpop.f32.mrf.mxu0
  %336 = vmatprep.mubr.bf16.mxu0 0
  %337 = vmatmul.mubr.bf16.gmra.mxu0 %v271
  %v338 = vpop.f32.mrf.mxu0
  %v339 = vadd.f32 %v249, %v338
  %v340 = vpop.f32.mrf.mxu0
  %v341 = vpop.f32.mrf.mxu0
  %v342 = vadd.f32 %v249, %v341
  %v343 = vpop.f32.mrf.mxu0
  %344 = vmatprep.mubr.bf16.mxu0 0
  %345 = vmatmul.mubr.bf16.gmra.mxu0 %v274
  %v346 = vpop.f32.mrf.mxu0
  %v347 = vadd.f32 %v249, %v346
  %v348 = vpop.f32.mrf.mxu0
  %v349 = vpop.f32.mrf.mxu0
  %v350 = vadd.f32 %v249, %v349
  %v351 = vpop.f32.mrf.mxu0
  %352 = vmatprep.mubr.bf16.mxu0 0
  %353 = vmatmul.mubr.bf16.gmra.mxu0 %v277
  %v354 = vpop.f32.mrf.mxu0
  %v355 = vadd.f32 %v249, %v354
  %v356 = vpop.f32.mrf.mxu0
  %v357 = vpop.f32.mrf.mxu0
  %v358 = vadd.f32 %v249, %v357
  %v359 = vpop.f32.mrf.mxu0
  %360 = vmatprep.mubr.bf16.mxu0 0
  %361 = vmatmul.mubr.bf16.gmra.mxu0 %v280
  %v362 = vpop.f32.mrf.mxu0
  %v363 = vadd.f32 %v249, %v362
  %v364 = vpop.f32.mrf.mxu0
  %v365 = vpop.f32.mrf.mxu0
  %v366 = vadd.f32 %v249, %v365
  %v367 = vpop.f32.mrf.mxu0
  %368 = vmatprep.mubr.bf16.mxu0 0
  %369 = vmatmul.mubr.bf16.gmra.mxu0 %v283
  %v370 = vpop.f32.mrf.mxu0
  %v371 = vadd.f32 %v249, %v370
  %v372 = vpop.f32.mrf.mxu0
  %v373 = vpop.f32.mrf.mxu0
  %v374 = vadd.f32 %v249, %v373
  %v375 = vpop.f32.mrf.mxu0
  %376 = vmatprep.mubr.bf16.mxu0 0
  %377 = vmatmul.mubr.bf16.gmra.mxu0 %v286
  %v378 = vpop.f32.mrf.mxu0
  %v379 = vadd.f32 %v249, %v378
  %v380 = vpop.f32.mrf.mxu0
  %v381 = vpop.f32.mrf.mxu0
  %v382 = vadd.f32 %v249, %v381
  %v383 = vpop.f32.mrf.mxu0
  %384 = vdwg.mxu0
  %v385 = vxor.u32 %v323, 2147483648
  %v386 = vxor.u32 %v326, 2147483648
  %v387 = vxor.u32 %v331, 2147483648
  %v388 = vxor.u32 %v334, 2147483648
  %v389 = vxor.u32 %v339, 2147483648
  %v390 = vxor.u32 %v342, 2147483648
  %v391 = vxor.u32 %v347, 2147483648
  %v392 = vxor.u32 %v350, 2147483648
  %v393 = vxor.u32 %v355, 2147483648
  %v394 = vxor.u32 %v358, 2147483648
  %v395 = vxor.u32 %v363, 2147483648
  %v396 = vxor.u32 %v366, 2147483648
  %v397 = vxor.u32 %v371, 2147483648
  %v398 = vxor.u32 %v374, 2147483648
  %v399 = vxor.u32 %v379, 2147483648
  %v400 = vxor.u32 %v382, 2147483648
  %v401 = vmul.f32 %v385, 1.442695
  %v402 = vpow.pop %v401
  %v403 = vmul.f32 %v386, 1.442695
  %v404 = vpow.pop %v403
  %v405 = vmul.f32 %v387, 1.442695
  %v406 = vpow.pop %v405
  %v407 = vmul.f32 %v388, 1.442695
  %v408 = vpow.pop %v407
  %v409 = vmul.f32 %v389, 1.442695
  %v410 = vpow.pop %v409
  %v411 = vmul.f32 %v390, 1.442695
  %v412 = vpow.pop %v411
  %v413 = vmul.f32 %v391, 1.442695
  %v414 = vpow.pop %v413
  %v415 = vmul.f32 %v392, 1.442695
  %v416 = vpow.pop %v415
  %v417 = vmul.f32 %v393, 1.442695
  %v418 = vpow.pop %v417
  %v419 = vmul.f32 %v394, 1.442695
  %v420 = vpow.pop %v419
  %v421 = vmul.f32 %v395, 1.442695
  %v422 = vpow.pop %v421
  %v423 = vmul.f32 %v396, 1.442695
  %v424 = vpow.pop %v423
  %v425 = vmul.f32 %v397, 1.442695
  %v426 = vpow.pop %v425
  %v427 = vmul.f32 %v398, 1.442695
  %v428 = vpow.pop %v427
  %v429 = vmul.f32 %v399, 1.442695
  %v430 = vpow.pop %v429
  %v431 = vmul.f32 %v400, 1.442695
  %v432 = vpow.pop %v431
  %v433 = vadd.f32 %v402, 1.0
  %v434 = vadd.f32 %v404, 1.0
  %v435 = vadd.f32 %v406, 1.0
  %v436 = vadd.f32 %v408, 1.0
  %v437 = vadd.f32 %v410, 1.0
  %v438 = vadd.f32 %v412, 1.0
  %v439 = vadd.f32 %v414, 1.0
  %v440 = vadd.f32 %v416, 1.0
  %v441 = vadd.f32 %v418, 1.0
  %v442 = vadd.f32 %v420, 1.0
  %v443 = vadd.f32 %v422, 1.0
  %v444 = vadd.f32 %v424, 1.0
  %v445 = vadd.f32 %v426, 1.0
  %v446 = vadd.f32 %v428, 1.0
  %v447 = vadd.f32 %v430, 1.0
  %v448 = vadd.f32 %v432, 1.0
  %v449 = vrcp.pop %v433
  %v450 = vmul.f32 1.0, %v449
  %v451 = vrcp.pop %v434
  %v452 = vmul.f32 1.0, %v451
  %v453 = vrcp.pop %v435
  %v454 = vmul.f32 1.0, %v453
  %v455 = vrcp.pop %v436
  %v456 = vmul.f32 1.0, %v455
  %v457 = vrcp.pop %v437
  %v458 = vmul.f32 1.0, %v457
  %v459 = vrcp.pop %v438
  %v460 = vmul.f32 1.0, %v459
  %v461 = vrcp.pop %v439
  %v462 = vmul.f32 1.0, %v461
  %v463 = vrcp.pop %v440
  %v464 = vmul.f32 1.0, %v463
  %v465 = vrcp.pop %v441
  %v466 = vmul.f32 1.0, %v465
  %v467 = vrcp.pop %v442
  %v468 = vmul.f32 1.0, %v467
  %v469 = vrcp.pop %v443
  %v470 = vmul.f32 1.0, %v469
  %v471 = vrcp.pop %v444
  %v472 = vmul.f32 1.0, %v471
  %v473 = vrcp.pop %v445
  %v474 = vmul.f32 1.0, %v473
  %v475 = vrcp.pop %v446
  %v476 = vmul.f32 1.0, %v475
  %v477 = vrcp.pop %v447
  %v478 = vmul.f32 1.0, %v477
  %v479 = vrcp.pop %v448
  %v480 = vmul.f32 1.0, %v479
  %v481 = vmul.f32 %v323, %v450
  %v482 = vmul.f32 %v326, %v452
  %v483 = vmul.f32 %v331, %v454
  %v484 = vmul.f32 %v334, %v456
  %v485 = vmul.f32 %v339, %v458
  %v486 = vmul.f32 %v342, %v460
  %v487 = vmul.f32 %v347, %v462
  %v488 = vmul.f32 %v350, %v464
  %v489 = vmul.f32 %v355, %v466
  %v490 = vmul.f32 %v358, %v468
  %v491 = vmul.f32 %v363, %v470
  %v492 = vmul.f32 %v366, %v472
  %v493 = vmul.f32 %v371, %v474
  %v494 = vmul.f32 %v374, %v476
  %v495 = vmul.f32 %v379, %v478
  %v496 = vmul.f32 %v382, %v480
  %v497 = vld [vmem:[%s5] sm:$0x1]
  %v499 = vlaneseq
  %v500 = vshrl.u32 %v499, 7
  %v501 = vsub.s32 0, %v500
  %v502 = vrot.slane %v497, %v501
  %v504 = vmul.f32 %v481, %v502
  %v505 = vmul.f32 %v482, %v502
  %v506 = vmul.f32 %v483, %v502
  %v507 = vmul.f32 %v484, %v502
  %v508 = vmul.f32 %v485, %v502
  %v509 = vmul.f32 %v486, %v502
  %v510 = vmul.f32 %v487, %v502
  %v511 = vmul.f32 %v488, %v502
  %v512 = vmul.f32 %v489, %v502
  %v513 = vmul.f32 %v490, %v502
  %v514 = vmul.f32 %v491, %v502
  %v515 = vmul.f32 %v492, %v502
  %v516 = vmul.f32 %v493, %v502
  %v517 = vmul.f32 %v494, %v502
  %v518 = vmul.f32 %v495, %v502
  %v519 = vmul.f32 %v496, %v502
  %v520 = vsel %vm263, %v504, 0.0
  %521 = vadd.xlane.f32.xlu0 %v520
  %v522 = vpop.xlane.xlu0 %521
  %v523 = vsel %vm263, %v505, 0.0
  %524 = vadd.xlane.f32.xlu0 %v523
  %v525 = vpop.xlane.xlu0 %524
  %v526 = vsel %vm263, %v506, 0.0
  %527 = vadd.xlane.f32.xlu0 %v526
  %v528 = vpop.xlane.xlu0 %527
  %v529 = vsel %vm263, %v507, 0.0
  %530 = vadd.xlane.f32.xlu0 %v529
  %v531 = vpop.xlane.xlu0 %530
  %v532 = vsel %vm263, %v508, 0.0
  %533 = vadd.xlane.f32.xlu0 %v532
  %v534 = vpop.xlane.xlu0 %533
  %v535 = vsel %vm263, %v509, 0.0
  %536 = vadd.xlane.f32.xlu0 %v535
  %v537 = vpop.xlane.xlu0 %536
  %v538 = vsel %vm263, %v510, 0.0
  %539 = vadd.xlane.f32.xlu0 %v538
  %v540 = vpop.xlane.xlu0 %539
  %v541 = vsel %vm263, %v511, 0.0
  %542 = vadd.xlane.f32.xlu0 %v541
  %v543 = vpop.xlane.xlu0 %542
  %v544 = vsel %vm263, %v512, 0.0
  %545 = vadd.xlane.f32.xlu0 %v544
  %v546 = vpop.xlane.xlu0 %545
  %v547 = vsel %vm263, %v513, 0.0
  %548 = vadd.xlane.f32.xlu0 %v547
  %v549 = vpop.xlane.xlu0 %548
  %v550 = vsel %vm263, %v514, 0.0
  %551 = vadd.xlane.f32.xlu0 %v550
  %v552 = vpop.xlane.xlu0 %551
  %v553 = vsel %vm263, %v515, 0.0
  %554 = vadd.xlane.f32.xlu0 %v553
  %v555 = vpop.xlane.xlu0 %554
  %v556 = vsel %vm263, %v516, 0.0
  %557 = vadd.xlane.f32.xlu0 %v556
  %v558 = vpop.xlane.xlu0 %557
  %v559 = vsel %vm263, %v517, 0.0
  %560 = vadd.xlane.f32.xlu0 %v559
  %v561 = vpop.xlane.xlu0 %560
  %v562 = vsel %vm263, %v518, 0.0
  %563 = vadd.xlane.f32.xlu0 %v562
  %v564 = vpop.xlane.xlu0 %563
  %v565 = vsel %vm263, %v519, 0.0
  %566 = vadd.xlane.f32.xlu0 %v565
  %v567 = vpop.xlane.xlu0 %566
  %v568 = vlaneseq
  %v569 = vand.u32 %v568, 127
  %vm570 = vcmp.eq.s32.totalorder %v569, 3
  %v571 = vsel %vm570, 1.0, %v522
  %v572 = vsel %vm570, 1.0, %v525
  %v573 = vsel %vm570, 1.0, %v528
  %v574 = vsel %vm570, 1.0, %v531
  %v575 = vsel %vm570, 1.0, %v534
  %v576 = vsel %vm570, 1.0, %v537
  %v577 = vsel %vm570, 1.0, %v540
  %v578 = vsel %vm570, 1.0, %v543
  %v579 = vsel %vm570, 1.0, %v546
  %v580 = vsel %vm570, 1.0, %v549
  %v581 = vsel %vm570, 1.0, %v552
  %v582 = vsel %vm570, 1.0, %v555
  %v583 = vsel %vm570, 1.0, %v558
  %v584 = vsel %vm570, 1.0, %v561
  %v585 = vsel %vm570, 1.0, %v564
  %v586 = vsel %vm570, 1.0, %v567
  %v587 = vld [vmem:[%s70] sm:$0xff]
  %v588 = vld [vmem:[%s70 + $0x8] sm:$0xff]
  %v589 = vld [vmem:[%s70 + $0x10] sm:$0xff]
  %v590 = vld [vmem:[%s70 + $0x18] sm:$0xff]
  %v591 = vld [vmem:[%s70 + $0x20] sm:$0xff]
  %v592 = vld [vmem:[%s70 + $0x28] sm:$0xff]
  %v593 = vld [vmem:[%s70 + $0x30] sm:$0xff]
  %v594 = vld [vmem:[%s70 + $0x38] sm:$0xff]
  %v595 = vld [vmem:[%s70 + $0x40] sm:$0xff]
  %v596 = vld [vmem:[%s70 + $0x48] sm:$0xff]
  %v597 = vld [vmem:[%s70 + $0x50] sm:$0xff]
  %v598 = vld [vmem:[%s70 + $0x58] sm:$0xff]
  %v599 = vld [vmem:[%s70 + $0x60] sm:$0xff]
  %v600 = vld [vmem:[%s70 + $0x68] sm:$0xff]
  %v601 = vld [vmem:[%s70 + $0x70] sm:$0xff]
  %v602 = vld [vmem:[%s70 + $0x78] sm:$0xff]
  %v603 = vmul.f32 %v587, %v571
  %v604 = vmul.f32 %v588, %v572
  %v605 = vmul.f32 %v589, %v573
  %v606 = vmul.f32 %v590, %v574
  %v607 = vmul.f32 %v591, %v575
  %v608 = vmul.f32 %v592, %v576
  %v609 = vmul.f32 %v593, %v577
  %v610 = vmul.f32 %v594, %v578
  %v611 = vmul.f32 %v595, %v579
  %v612 = vmul.f32 %v596, %v580
  %v613 = vmul.f32 %v597, %v581
  %v614 = vmul.f32 %v598, %v582
  %v615 = vmul.f32 %v599, %v583
  %v616 = vmul.f32 %v600, %v584
  %v617 = vmul.f32 %v601, %v585
  %v618 = vmul.f32 %v602, %v586
  %v619 = vlaneseq
  %v620 = vshrl.u32 %v619, 7
  %v621 = vld [vmem:[%s63] sm:$0x1]
  %v622 = vlaneseq
  %v623 = vshrl.u32 %v622, 7
  %v624 = vsub.s32 0, %v623
  %v625 = vrot.slane %v621, %v624
  %vm626 = vcmp.eq.s32.totalorder %v620, %v625
  %v627 = vsel %vm626, 1, 0
  %v628 = vcvt.s32.f32 %v627
  %v629 = vld [vmem:[%s6] sm:$0xff]
  %630 = vmatprep.subr.mxu0 0.0
  %631 = vmatpush1.msra.mxu0 %v618
  %632 = vmatprep.subr.mxu0 0.0
  %633 = vmatpush1.msra.mxu0 %v617
  %634 = vmatprep.subr.mxu0 0.0
  %635 = vmatpush1.msra.mxu0 %v616
  %636 = vmatprep.subr.mxu0 0.0
  %637 = vmatpush1.msra.mxu0 %v615
  %638 = vmatprep.subr.mxu0 0.0
  %639 = vmatpush1.msra.mxu0 %v614
  %640 = vmatprep.subr.mxu0 0.0
  %641 = vmatpush1.msra.mxu0 %v613
  %642 = vmatprep.subr.mxu0 0.0
  %643 = vmatpush1.msra.mxu0 %v612
  %644 = vmatprep.subr.mxu0 0.0
  %645 = vmatpush1.msra.mxu0 %v611
  %646 = vmatprep.subr.mxu0 0.0
  %647 = vmatpush1.msra.mxu0 %v610
  %648 = vmatprep.subr.mxu0 0.0
  %649 = vmatpush1.msra.mxu0 %v609
  %650 = vmatprep.subr.mxu0 0.0
  %651 = vmatpush1.msra.mxu0 %v608
  %652 = vmatprep.subr.mxu0 0.0
  %653 = vmatpush1.msra.mxu0 %v607
  %654 = vmatprep.subr.mxu0 0.0
  %655 = vmatpush1.msra.mxu0 %v606
  %656 = vmatprep.subr.mxu0 0.0
  %657 = vmatpush1.msra.mxu0 %v605
  %658 = vmatprep.subr.mxu0 0.0
  %659 = vmatpush1.msra.mxu0 %v604
  %660 = vmatprep.subr.mxu0 0.0
  %661 = vmatpush1.msra.mxu0 %v603
  %662 = vmatprep.subr.mxu0 0.0
  %663 = vmatpush2.msra.mxu0 0.0
  %664 = vmatprep.subr.mxu0 0.0
  %665 = vmatpush2.msra.mxu0 0.0
  %666 = vmatprep.subr.mxu0 0.0
  %667 = vmatpush2.msra.mxu0 0.0
  %668 = vmatprep.subr.mxu0 0.0
  %669 = vmatpush2.msra.mxu0 0.0
  %670 = vmatprep.subr.mxu0 0.0
  %671 = vmatpush2.msra.mxu0 0.0
  %672 = vmatprep.subr.mxu0 0.0
  %673 = vmatpush2.msra.mxu0 0.0
  %674 = vmatprep.subr.mxu0 0.0
  %675 = vmatpush2.msra.mxu0 0.0
  %676 = vmatprep.subr.mxu0 0.0
  %677 = vmatpush2.msra.mxu0 0.0
  %678 = vmatprep.subr.mxu0 0.0
  %679 = vmatpush2.msra.mxu0 0.0
  %680 = vmatprep.subr.mxu0 0.0
  %681 = vmatpush2.msra.mxu0 0.0
  %682 = vmatprep.subr.mxu0 0.0
  %683 = vmatpush2.msra.mxu0 0.0
  %684 = vmatprep.subr.mxu0 0.0
  %685 = vmatpush2.msra.mxu0 0.0
  %686 = vmatprep.subr.mxu0 0.0
  %687 = vmatpush2.msra.mxu0 0.0
  %688 = vmatprep.subr.mxu0 0.0
  %689 = vmatpush2.msra.mxu0 0.0
  %690 = vmatprep.subr.mxu0 0.0
  %691 = vmatpush2.msra.mxu0 0.0
  %692 = vmatprep.subr.mxu0 0.0
  %693 = vmatpush2.msra.mxu0 0.0
  %694 = vmatprep.mubr.f32.mxu0 0.0
  %695 = vmatmul.mubr.f32.gmra.mxu0 %v628
  %v696 = vpop.f32.mrf.mxu0
  %v697 = vadd.f32 0.0, %v696
  %v698 = vpop.f32.mrf.mxu0
  %699 = vdwg.mxu0
  %v700 = vadd.f32 %v629, %v697
  %vm701 = vcmask 31744
  %702 = vst.msk [vmem:[%s6] sm:$0xff] %vm701, %v700
  // Predicated region
  $region30: #{tpu_custom_call.1} parent=0 // pred_check
    _
  $region31: #{tpu_custom_call.1} parent=0 // pred_check_branch
    %704 = sbr.rel (0) target = $region33
  $region32: #{tpu_custom_call.1} parent=0 // pred_region
    _
  $region33: #{tpu_custom_call.1} parent=0 // pred_fallthru
    _
  // Predicated region
  $region34: #{tpu_custom_call.1} parent=0 // pred_check
    _
  $region35: #{tpu_custom_call.1} parent=0 // pred_check_branch
    %706 = sbr.rel (0) target = $region37
  $region36: #{tpu_custom_call.1} parent=0 // pred_region
    _
  $region37: #{tpu_custom_call.1} parent=0 // pred_fallthru
    _

</llo_original>
